<compile_context>
chip_gen: v7x
topology: tpu7x:2x2x1
jax: 0.10.0
libtpu: 0.0.40
codegen_flags: <defaults>
</compile_context>

<pallas_src>
import functools

import jax
import jax.numpy as jnp
from jax.experimental import pallas as pl
from jax.experimental.pallas import tpu as pltpu


def _round_up(x, m):
    return (x + m - 1) // m * m


def _label_smoothing_kernel(pred_ref, tgt_ref, out_ref, acc_ref, *,
                            classes, smoothing, needs_mask):
    i = pl.program_id(1)

    confidence = 1.0 - smoothing
    smooth_val = smoothing / (classes - 1)
    delta = confidence - smooth_val

    @pl.when(i == 0)
    def _init():
        acc_ref[...] = jnp.zeros_like(acc_ref)

    tgt = tgt_ref[...]                                     # (rows, 128) int32

    # Dense (rows, 128) per-class tiles; classes sit on the leading, untiled
    # axis so there is no sublane padding and no cross-lane work anywhere.
    p = [pred_ref[c].astype(jnp.float32) for c in range(classes)]

    # Per-example max over classes: pure VPU.
    m = p[0]
    for c in range(1, classes):
        m = jnp.maximum(m, p[c])

    shifted0 = p[0] - m
    sum_shifted = shifted0
    sum_e = jnp.exp(shifted0)                              # EUP
    sel = shifted0                                         # target == 0 default
    for c in range(1, classes):
        sc = p[c] - m
        sum_shifted = sum_shifted + sc
        sum_e = sum_e + jnp.exp(sc)
        sel = jnp.where(tgt == c, sc, sel)                 # scatter_ equivalent

    lse = jnp.log(sum_e)

    # Algebraic form (no true_dist materialization):
    #   loss_i = -(smooth * sum_c logp[c] + (conf - smooth) * logp[target])
    #   sum_c logp[c] = sum_shifted - C * lse ; logp[target] = sel - lse
    per_ex = -(smooth_val * (sum_shifted - float(classes) * lse)
               + delta * (sel - lse))                      # (rows, 128)

    if needs_mask:
        # Padded examples carry the out-of-range sentinel target == classes.
        per_ex = jnp.where(tgt < classes, per_ex, 0.0)

    rows = per_ex.shape[0]
    # Fold the tile into the (8, 128) accumulator with vreg-aligned VPU adds
    # only (the reshape is (8,128)-tile aligned, hence free); the single
    # cross-lane reduce is deferred to the wrapper.
    acc_ref[...] += per_ex.reshape(rows // 8, 8, 128).sum(axis=0)

    @pl.when(i == pl.num_programs(1) - 1)
    def _finalize():
        out_ref[...] = acc_ref[...]


def label_smoothing_loss(pred, target, classes=3, smoothing=0.1,
                         tile_elems=131072, num_splits=2):
    """pred: (N, C) float, target: (N,) int -> scalar float32 loss."""
    n, c = pred.shape
    assert c == classes
    assert classes >= 2, "smoothing / (classes - 1) requires classes >= 2"

    # Tiles must be multiples of 8*128 elements so every block is layout-legal
    # ((8,128) rule) and the in-kernel (rows//8, 8, 128) fold is exact.
    tile_elems = _round_up(max(int(tile_elems), 1024), 1024)
    num_splits = max(1, int(num_splits))

    if n <= tile_elems:
        num_splits = 1
        n_pad = _round_up(n, 1024)
        block_elems = n_pad
        steps = 1
    else:
        if n < num_splits * tile_elems:
            num_splits = 1
        block_elems = tile_elems
        n_pad = _round_up(n, num_splits * block_elems)
        steps = n_pad // (num_splits * block_elems)
    block_rows = block_elems // 128
    rows = n_pad // 128
    needs_mask = (n_pad != n)

    target = target.astype(jnp.int32)
    if needs_mask:
        pad = n_pad - n
        pred = jnp.pad(pred, ((0, pad), (0, 0)))
        target = jnp.pad(target, ((0, pad),), constant_values=classes)

    # TODO(synk): accept class-major (C, N) predictions from the producer (or
    # fuse this transpose into it); this relayout is an extra HBM round trip
    # that dominates end-to-end traffic at large N.
    pred_cm = jnp.transpose(pred).reshape(classes, rows, 128)
    tgt_r = target.reshape(rows, 128)

    kernel = functools.partial(
        _label_smoothing_kernel,
        classes=classes, smoothing=smoothing, needs_mask=needs_mask)

    itemsize = jnp.dtype(pred.dtype).itemsize
    cost = pl.CostEstimate(
        flops=10 * n_pad * classes,
        transcendentals=n_pad * (classes + 1),
        bytes_accessed=(n_pad * classes * itemsize + n_pad * 4
                        + num_splits * 8 * 128 * 4))

    partials = pl.pallas_call(
        kernel,
        out_shape=jax.ShapeDtypeStruct((num_splits, 8, 128), jnp.float32),
        grid_spec=pltpu.PrefetchScalarGridSpec(
            num_scalar_prefetch=0,
            grid=(num_splits, steps),
            in_specs=[
                pl.BlockSpec((classes, block_rows, 128),
                             lambda s, i: (0, s * steps + i, 0)),
                pl.BlockSpec((block_rows, 128),
                             lambda s, i: (s * steps + i, 0)),
            ],
            out_specs=pl.BlockSpec((None, 8, 128), lambda s, i: (s, 0, 0)),
            scratch_shapes=[pltpu.VMEM((8, 128), jnp.float32)],
        ),
        compiler_params=pltpu.CompilerParams(
            dimension_semantics=("parallel", "arbitrary"),
            # ~10 MiB actual footprint; 48 MiB cushion is below v7x's 64 MiB
            # physical VMEM and far below v5e/v6e's 128 MiB.
            vmem_limit_bytes=48 * 1024 * 1024),
        cost_estimate=cost,
    )(pred_cm, tgt_r)

    # Per-split partial sums -> scalar mean (tiny XLA reduce).
    return jnp.sum(partials) / jnp.float32(n)


def _reference(pred, target, classes=3, smoothing=0.1):
    confidence = 1.0 - smoothing
    logp = jax.nn.log_softmax(pred.astype(jnp.float32), axis=-1)
    true_dist = jnp.full_like(logp, smoothing / (classes - 1))
    true_dist = true_dist.at[jnp.arange(pred.shape[0]), target].set(confidence)
    return jnp.mean(jnp.sum(-true_dist * logp, axis=-1))


if __name__ == "__main__":
    key = jax.random.PRNGKey(0)
    k1, k2, k3, k4 = jax.random.split(key, 4)

    classes = 3

    # Small case: single (padded) block, grid (1, 1).
    batch = 8
    pred = jax.random.normal(k1, (batch, classes), dtype=jnp.float32)
    target = jax.random.randint(k2, (batch,), 0, classes, dtype=jnp.int32)
    loss = label_smoothing_loss(pred, target, classes=classes, smoothing=0.1)
    jax.block_until_ready(loss)
    ref = _reference(pred, target, classes=classes, smoothing=0.1)
    assert jnp.allclose(loss, ref, atol=1e-5, rtol=1e-4), (loss, ref)

    # Tiled path: grid (2 parallel splits, 2 steps) + padded-tail masking.
    batch2 = 2500
    pred2 = jax.random.normal(k3, (batch2, classes), dtype=jnp.float32)
    target2 = jax.random.randint(k4, (batch2,), 0, classes, dtype=jnp.int32)
    loss2 = label_smoothing_loss(pred2, target2, classes=classes,
                                 smoothing=0.1, tile_elems=1024)
    jax.block_until_ready(loss2)
    ref2 = _reference(pred2, target2, classes=classes, smoothing=0.1)
    assert jnp.allclose(loss2, ref2, atol=1e-5, rtol=1e-4), (loss2, ref2)

    print("KERNEL_OK")
</pallas_src>

<mosaic_0001>
module attributes {stable_mosaic.version = 11 : i64} {
  func.func @_label_smoothing_kernel(%arg0: i32, %arg1: i32, %arg2: memref<3x8x128xf32, #tpu.memory_space<vmem>>, %arg3: memref<8x128xi32, #tpu.memory_space<vmem>>, %arg4: memref<1x8x128xf32, #tpu.memory_space<vmem>>, %arg5: memref<8x128xf32, #tpu.memory_space<vmem>>) attributes {dimension_semantics = [#tpu.dimension_semantics<parallel>, #tpu.dimension_semantics<arbitrary>], iteration_bounds = array<i64: 1, 1>, scalar_prefetch = 0 : i64, scratch_operands = 1 : i64, tpu.core_type = #tpu.core_type<tc>, window_params = [{transform_indices = @transform_0, window_bounds = array<i64: 3, 8, 128>}, {transform_indices = @transform_1, window_bounds = array<i64: 8, 128>}, {transform_indices = @transform_2, window_bounds = array<i64: 1, 8, 128>}]} {
    %c0_i32 = arith.constant 0 : i32
    %0 = arith.cmpi eq, %arg1, %c0_i32 : i32
    %1 = arith.extui %0 : i1 to i32
    %c0_i32_0 = arith.constant 0 : i32
    %2 = arith.cmpi ne, %1, %c0_i32_0 : i32
    scf.if %2 {
      %cst_20 = arith.constant 0.000000e+00 : f32
      %52 = vector.broadcast %cst_20 : f32 to vector<8x128xf32>
      %c0_21 = arith.constant 0 : index
      %c0_22 = arith.constant 0 : index
      %53 = vector.load %arg5[%c0_21, %c0_22] : memref<8x128xf32, #tpu.memory_space<vmem>>, vector<8x128xf32>
      tpu.vector_store %arg5[%c0_21, %c0_22], %52 {strides = array<i32>} : memref<8x128xf32, #tpu.memory_space<vmem>>, vector<8x128xf32>,
    } else {
    }
    %c0 = arith.constant 0 : index
    %c0_1 = arith.constant 0 : index
    %3 = vector.load %arg3[%c0, %c0_1] : memref<8x128xi32, #tpu.memory_space<vmem>>, vector<8x128xi32>
    %c0_2 = arith.constant 0 : index
    %c0_3 = arith.constant 0 : index
    %c0_4 = arith.constant 0 : index
    %4 = vector.load %arg2[%c0_2, %c0_3, %c0_4] : memref<3x8x128xf32, #tpu.memory_space<vmem>>, vector<1x8x128xf32>
    %5 = vector.shape_cast %4 : vector<1x8x128xf32> to vector<8x128xf32>
    %c1 = arith.constant 1 : index
    %c0_5 = arith.constant 0 : index
    %c0_6 = arith.constant 0 : index
    %6 = vector.load %arg2[%c1, %c0_5, %c0_6] : memref<3x8x128xf32, #tpu.memory_space<vmem>>, vector<1x8x128xf32>
    %7 = vector.shape_cast %6 : vector<1x8x128xf32> to vector<8x128xf32>
    %c2 = arith.constant 2 : index
    %c0_7 = arith.constant 0 : index
    %c0_8 = arith.constant 0 : index
    %8 = vector.load %arg2[%c2, %c0_7, %c0_8] : memref<3x8x128xf32, #tpu.memory_space<vmem>>, vector<1x8x128xf32>
    %9 = vector.shape_cast %8 : vector<1x8x128xf32> to vector<8x128xf32>
    %10 = arith.maximumf %5, %7 : vector<8x128xf32>
    %11 = arith.maximumf %10, %9 : vector<8x128xf32>
    %12 = arith.subf %5, %11 : vector<8x128xf32>
    %13 = math.exp %12 : vector<8x128xf32>
    %14 = arith.subf %7, %11 : vector<8x128xf32>
    %15 = arith.addf %12, %14 : vector<8x128xf32>
    %16 = math.exp %14 : vector<8x128xf32>
    %17 = arith.addf %13, %16 : vector<8x128xf32>
    %c1_i32 = arith.constant 1 : i32
    %18 = vector.broadcast %c1_i32 : i32 to vector<8x128xi32>
    %19 = arith.cmpi eq, %3, %18 : vector<8x128xi32>
    %20 = arith.select %19, %14, %12 : vector<8x128xi1>, vector<8x128xf32>
    %21 = arith.subf %9, %11 : vector<8x128xf32>
    %22 = arith.addf %15, %21 : vector<8x128xf32>
    %23 = math.exp %21 : vector<8x128xf32>
    %24 = arith.addf %17, %23 : vector<8x128xf32>
    %c2_i32 = arith.constant 2 : i32
    %25 = vector.broadcast %c2_i32 : i32 to vector<8x128xi32>
    %26 = arith.cmpi eq, %3, %25 : vector<8x128xi32>
    %27 = arith.select %26, %21, %20 : vector<8x128xi1>, vector<8x128xf32>
    %28 = math.log %24 : vector<8x128xf32>
    %cst = arith.constant 3.000000e+00 : f32
    %29 = vector.broadcast %cst : f32 to vector<8x128xf32>
    %30 = arith.mulf %29, %28 : vector<8x128xf32>
    %31 = arith.subf %22, %30 : vector<8x128xf32>
    %cst_9 = arith.constant 5.000000e-02 : f32
    %32 = vector.broadcast %cst_9 : f32 to vector<8x128xf32>
    %33 = arith.mulf %32, %31 : vector<8x128xf32>
    %34 = arith.subf %27, %28 : vector<8x128xf32>
    %cst_10 = arith.constant 8.500000e-01 : f32
    %35 = vector.broadcast %cst_10 : f32 to vector<8x128xf32>
    %36 = arith.mulf %35, %34 : vector<8x128xf32>
    %37 = arith.addf %33, %36 : vector<8x128xf32>
    %cst_11 = arith.constant 0.000000e+00 : f32
    %38 = vector.broadcast %cst_11 : f32 to vector<8x128xf32>
    %39 = arith.subf %38, %37 : vector<8x128xf32>
    %c3_i32 = arith.constant 3 : i32
    %40 = vector.broadcast %c3_i32 : i32 to vector<8x128xi32>
    %41 = arith.cmpi slt, %3, %40 : vector<8x128xi32>
    %cst_12 = arith.constant 0.000000e+00 : f32
    %42 = vector.broadcast %cst_12 : f32 to vector<8x128xf32>
    %43 = arith.select %41, %39, %42 : vector<8x128xi1>, vector<8x128xf32>
    %c0_13 = arith.constant 0 : index
    %c0_14 = arith.constant 0 : index
    %44 = vector.load %arg5[%c0_13, %c0_14] : memref<8x128xf32, #tpu.memory_space<vmem>>, vector<8x128xf32>
    %45 = vector.shape_cast %43 : vector<8x128xf32> to vector<1x8x128xf32>
    %cst_15 = arith.constant dense<0.000000e+00> : vector<8x128xf32>
    %46 = vector.multi_reduction <add>, %45, %cst_15 [0] : vector<1x8x128xf32> to vector<8x128xf32>
    %47 = arith.addf %44, %46 : vector<8x128xf32>
    %c0_16 = arith.constant 0 : index
    %c0_17 = arith.constant 0 : index
    %48 = vector.load %arg5[%c0_16, %c0_17] : memref<8x128xf32, #tpu.memory_space<vmem>>, vector<8x128xf32>
    tpu.vector_store %arg5[%c0_16, %c0_17], %47 {strides = array<i32>} : memref<8x128xf32, #tpu.memory_space<vmem>>, vector<8x128xf32>,
    %c0_i32_18 = arith.constant 0 : i32
    %49 = arith.cmpi eq, %arg1, %c0_i32_18 : i32
    %50 = arith.extui %49 : i1 to i32
    %c0_i32_19 = arith.constant 0 : i32
    %51 = arith.cmpi ne, %50, %c0_i32_19 : i32
    scf.if %51 {
      %c0_20 = arith.constant 0 : index
      %c0_21 = arith.constant 0 : index
      %52 = vector.load %arg5[%c0_20, %c0_21] : memref<8x128xf32, #tpu.memory_space<vmem>>, vector<8x128xf32>
      %c0_22 = arith.constant 0 : index
      %c0_23 = arith.constant 0 : index
      %c0_24 = arith.constant 0 : index
      %53 = vector.load %arg4[%c0_22, %c0_23, %c0_24] : memref<1x8x128xf32, #tpu.memory_space<vmem>>, vector<1x8x128xf32>
      %54 = vector.shape_cast %53 : vector<1x8x128xf32> to vector<8x128xf32>
      %55 = vector.shape_cast %52 : vector<8x128xf32> to vector<1x8x128xf32>
      tpu.vector_store %arg4[%c0_22, %c0_23, %c0_24], %55 {strides = array<i32>} : memref<1x8x128xf32, #tpu.memory_space<vmem>>, vector<1x8x128xf32>,
    } else {
    }
    return
  }
  func.func @transform_0(%arg0: i32, %arg1: i32) -> (i32, i32, i32) {
    %c1_i32 = arith.constant 1 : i32
    %0 = arith.muli %arg0, %c1_i32 : i32
    %1 = arith.addi %0, %arg1 : i32
    %c0_i32 = arith.constant 0 : i32
    %c0_i32_0 = arith.constant 0 : i32
    %c0_i32_1 = arith.constant 0 : i32
    return %c0_i32, %1, %c0_i32_0 : i32, i32, i32
  }
  func.func @transform_1(%arg0: i32, %arg1: i32) -> (i32, i32) {
    %c1_i32 = arith.constant 1 : i32
    %0 = arith.muli %arg0, %c1_i32 : i32
    %1 = arith.addi %0, %arg1 : i32
    %c0_i32 = arith.constant 0 : i32
    %c0_i32_0 = arith.constant 0 : i32
    return %1, %c0_i32 : i32, i32
  }
  func.func @transform_2(%arg0: i32, %arg1: i32) -> (i32, i32, i32) {
    %c0_i32 = arith.constant 0 : i32
    %c0_i32_0 = arith.constant 0 : i32
    %c0_i32_1 = arith.constant 0 : i32
    return %arg0, %c0_i32, %c0_i32_0 : i32, i32, i32
  }
}

</mosaic_0001>

<llo_original>
// kernel: tpu_custom_call.1
$region0: #{tpu_custom_call.1}
  #allocation0 [shape = 'u32[]', space=smem, size = 0x4, offset = 0x4, fixed_abs, tag = 'smem constant byte address 0x4 - core index']
  #allocation1 [shape = 'u32[144,128]{1,0:T(1,128)}', space=vmem, size = 0x12000, scoped, tag = 'internal scratch']
  #allocation2 [shape = 'f32[8,128]{1,0:T(8,128)}', space=vmem, size = 0x1000, scoped, tag = 'scratch operand']
  %s0 = inlined_call_operand.hbm [shape: f32[3,8,128], index: 0, kind: input, shape index: {}]
  %s1 = inlined_call_operand.hbm [shape: s32[8,128], index: 1, kind: input, shape index: {}]
  %s2 = inlined_call_operand.hbm [shape: f32[1,8,128], index: 2, kind: output, shape index: {}]
  %s3 = sld [smem:[#allocation0]]
  $region34: #{tpu_custom_call.1} parent=0
    _
  %s5 = ssub.s32 1, %s3
  %s6 = scalar_select 0, %s5, %s3
  $region1: #{tpu_custom_call.1} parent=0
    #allocation3 [shape = 'u8[12288]{0}', space=vmem, size = 0x3000, scoped, tag = 'input window, operand 0, single buffered']
    #allocation4 [shape = 's32[1]{0}', space=sflag, size = 0x4, scoped, tag = 'scoped memory for tpu_custom_call.1']
    #allocation5 [shape = 's32[1]{0}', space=sflag, size = 0x4, scoped, tag = 'scoped memory for tpu_custom_call.1']
    #allocation6 [shape = 'u8[4096]{0}', space=vmem, size = 0x1000, scoped, tag = 'input window, operand 1, single buffered']
    #allocation7 [shape = 's32[1]{0}', space=sflag, size = 0x4, scoped, tag = 'scoped memory for tpu_custom_call.1']
    #allocation8 [shape = 'u8[4096]{0}', space=vmem, size = 0x1000, scoped, tag = 'output window, operand 0, single buffered']
    %7 = vsyncpa [#allocation4], 0
    %8 = vsyncpa [#allocation7], 0
    %9 = vsyncpa [#allocation5], 0
    // Predicated region
    $region2: #{tpu_custom_call.1} parent=1 // pred_check
      _
    $region3: #{tpu_custom_call.1} parent=1 // pred_check_branch
      %11 = sbr.rel (0) target = $region5
    $region4: #{tpu_custom_call.1} parent=1 // pred_region
      %s12 = sadd.s32 0, 0
      %s14 = ssub.s32 384, 384
      %15 = vsyncadd [#allocation4], %s14
      %s16 = smul.addr %s12, 128
      %s17 = scalar_lea.hbm %s0, %s16
      %s18 = sshll.u32 [#allocation3], 4
      %s19 = int_to_ptr.vmem [resolvable:$true] %s18
      %24 = dma.hbm_to_vmem [thread:$0]  %s17, 384, %s19, [#allocation4], 128, 128, 8
    $region5: #{tpu_custom_call.1} parent=1 // pred_fallthru
      _
    // Predicated region
    $region6: #{tpu_custom_call.1} parent=1 // pred_check
      _
    $region7: #{tpu_custom_call.1} parent=1 // pred_check_branch
      %26 = sbr.rel (0) target = $region9
    $region8: #{tpu_custom_call.1} parent=1 // pred_region
      %s27 = sadd.s32 0, 0
      %s29 = ssub.s32 128, 128
      %30 = vsyncadd [#allocation7], %s29
      %s31 = smul.addr %s27, 128
      %s32 = scalar_lea.hbm %s1, %s31
      %s34 = sshll.u32 [#allocation6], 4
      %s35 = int_to_ptr.vmem [resolvable:$true] %s34
      %37 = dma.hbm_to_vmem [thread:$0]  %s32, 128, %s35, [#allocation7]
    $region9: #{tpu_custom_call.1} parent=1 // pred_fallthru
      _
    // Predicated region
    $region10: #{tpu_custom_call.1} parent=1 // pred_check
      _
    $region11: #{tpu_custom_call.1} parent=1 // pred_check_branch
      %39 = sbr.rel (0) target = $region13
    $region12: #{tpu_custom_call.1} parent=1 // pred_region
      %40 = dma.done [#allocation4], 384
    $region13: #{tpu_custom_call.1} parent=1 // pred_fallthru
      _
    // Predicated region
    $region14: #{tpu_custom_call.1} parent=1 // pred_check
      _
    $region15: #{tpu_custom_call.1} parent=1 // pred_check_branch
      %42 = sbr.rel (0) target = $region17
    $region16: #{tpu_custom_call.1} parent=1 // pred_region
      %43 = dma.done [#allocation7], 128
    $region17: #{tpu_custom_call.1} parent=1 // pred_fallthru
      _
    %s44 = sadd.s32 0, 0
    %s45 = sadd.s32 0, 0
    %p46 = scmp.eq.s32.totalorder 0, 0
    // Predicated region
    $region18: #{tpu_custom_call.1} parent=1 // pred_check
      %p47 = pneg %p46
    $region19: #{tpu_custom_call.1} parent=1 // pred_check_branch
      %49 = sbr.rel (%p47) target = $region21
    $region20: #{tpu_custom_call.1} parent=1 // pred_region
      %50 = vst [vmem:[#allocation2] sm:$0xff] 0.0
    $region21: #{tpu_custom_call.1} parent=1 // pred_fallthru
      _
    %v51 = vld [vmem:[#allocation6] sm:$0xff]
    %v52 = vld [vmem:[#allocation3] sm:$0xff]
    %s53 = scalar_lea.vmem [#allocation3], 8
    %v54 = vld [vmem:[%s53] sm:$0xff]
    %s55 = scalar_lea.vmem [#allocation3], 16
    %v56 = vld [vmem:[%s55] sm:$0xff]
    %v57 = vmax.f32 %v52, %v54
    %v58 = vmax.f32 %v57, %v56
    %v59 = vsub.f32 %v52, %v58
    %v60 = vmul.f32 %v59, 1.442695
    %v61 = vpow.pop %v60
    %v62 = vsub.f32 %v54, %v58
    %v63 = vadd.f32 %v59, %v62
    %v64 = vmul.f32 %v62, 1.442695
    %v65 = vpow.pop %v64
    %v66 = vadd.f32 %v61, %v65
    %vm67 = vcmp.eq.s32.totalorder %v51, 1
    %v68 = vsel %vm67, %v62, %v59
    %v69 = vsub.f32 %v56, %v58
    %v70 = vadd.f32 %v63, %v69
    %v71 = vmul.f32 %v69, 1.442695
    %v72 = vpow.pop %v71
    %v73 = vadd.f32 %v66, %v72
    %vm74 = vcmp.eq.s32.totalorder %v51, 2
    %v75 = vsel %vm74, %v69, %v68
    %v76 = vlog2.pop %v73
    %v77 = vmul.f32 %v76, 0.6931472
    %v78 = vmul.f32 %v77, 3.0
    %v79 = vsub.f32 %v70, %v78
    %v80 = vmul.f32 %v79, 0.05
    %v81 = vsub.f32 %v75, %v77
    %v82 = vmul.f32 %v81, 0.85
    %v83 = vadd.f32 %v80, %v82
    %v84 = vsub.f32 0.0, %v83
    %vm85 = vcmp.lt.s32.totalorder %v51, 3
    %v86 = vsel %vm85, %v84, 0.0
    %v87 = vld [vmem:[#allocation2] sm:$0xff]
    %v88 = vadd.f32 %v86, 0.0
    %v89 = vadd.f32 %v87, %v88
    %90 = vst [vmem:[#allocation2] sm:$0xff] %v89
    // Predicated region
    $region22: #{tpu_custom_call.1} parent=1 // pred_check
      %p91 = pneg %p46
    $region23: #{tpu_custom_call.1} parent=1 // pred_check_branch
      %93 = sbr.rel (%p91) target = $region25
    $region24: #{tpu_custom_call.1} parent=1 // pred_region
      %v94 = vld [vmem:[#allocation2] sm:$0xff]
      %95 = vst [vmem:[#allocation8] sm:$0xff] %v94
    $region25: #{tpu_custom_call.1} parent=1 // pred_fallthru
      _
    // Predicated region
    $region26: #{tpu_custom_call.1} parent=1 // pred_check
      _
    $region27: #{tpu_custom_call.1} parent=1 // pred_check_branch
      %97 = sbr.rel (0) target = $region29
    $region28: #{tpu_custom_call.1} parent=1 // pred_region
      %s99 = ssub.s32 128, 128
      %100 = vsyncadd [#allocation5], %s99
      %s102 = sshll.u32 [#allocation8], 4
      %s103 = int_to_ptr.vmem [resolvable:$true] %s102
      %105 = dma.vmem_to_hbm [thread:$0]  %s103, 128, %s2, [#allocation5]
    $region29: #{tpu_custom_call.1} parent=1 // pred_fallthru
      _
    // Predicated region
    $region30: #{tpu_custom_call.1} parent=1 // pred_check
      _
    $region31: #{tpu_custom_call.1} parent=1 // pred_check_branch
      %107 = sbr.rel (0) target = $region33
    $region32: #{tpu_custom_call.1} parent=1 // pred_region
      %108 = dma.done [#allocation5], 128
    $region33: #{tpu_custom_call.1} parent=1 // pred_fallthru
      _
    %109 = vsyncpa [#allocation4], 1
    %110 = vsyncpa [#allocation7], 1
    %111 = vsyncpa [#allocation5], 1

</llo_original>
